<compile_context>
chip_gen: v6e
topology: v6e:2x2x1
jax: 0.10.0
libtpu: 0.0.40
codegen_flags: <defaults>
</compile_context>

<pallas_src>
import functools

import jax
import jax.numpy as jnp
from jax.experimental import pallas as pl
from jax.experimental.pallas import tpu as pltpu

N_ACTIONS = 100
CELL = 4
REGIONNUM = CELL * CELL
N_STATES = 3 * REGIONNUM + 1     # 49
HIDDEN = 256

PAD_OUT = 128                    # N_ACTIONS padded up to a full lane width
MAX_TB = 2048                    # max batch tile for the large-batch path
SMALL_BATCH_MAX = 1024           # single-block (no-grid) path threshold


def _round_up(v, m):
    return ((v + m - 1) // m) * m


def _mlp_kernel(x_ref, w1_ref, b1_ref, w2_ref, b2_ref, o_ref):
    # fc1: (TB, 49) @ (49, 256) + (1, 256), ReLU.  bf16 operands, f32 accum.
    x = x_ref[...].astype(jnp.bfloat16)
    h = jnp.dot(x, w1_ref[...], preferred_element_type=jnp.float32)
    h = jnp.maximum(h + b1_ref[...], 0.0)
    # out: (TB, 256) @ (256, 128) + (1, 128) -> lane-dense (128-wide) store.
    o_ref[...] = (
        jnp.dot(h.astype(jnp.bfloat16), w2_ref[...],
                preferred_element_type=jnp.float32)
        + b2_ref[...]
    )


def _cost_estimate(batch):
    flops = 2 * batch * (N_STATES * HIDDEN + HIDDEN * PAD_OUT)
    bytes_accessed = (
        4 * batch * N_STATES          # x (f32)
        + 2 * N_STATES * HIDDEN       # w1 (bf16)
        + 4 * HIDDEN                  # b1 (f32)
        + 2 * HIDDEN * PAD_OUT        # w2 (bf16)
        + 4 * PAD_OUT                 # b2 (f32)
        + 4 * batch * PAD_OUT         # out (f32)
    )
    return pl.CostEstimate(
        flops=int(flops), transcendentals=0, bytes_accessed=int(bytes_accessed)
    )


def prepare_params(w1, b1, w2, b2):
    """One-time param prep (hoisted out of the forward pass).

    - w1 / w2 cast to bf16 (MXU throughput, half the VMEM/HBM bytes)
    - w2 / b2 zero-padded 100 -> 128 output columns (lane-dense kernel output;
      the padded columns produce exactly 0 and are sliced off in net_forward)
    """
    w1p = w1.astype(jnp.bfloat16)                                   # (49, 256)
    b1p = b1.astype(jnp.float32)                                    # (1, 256)
    w2p = jnp.pad(w2, ((0, 0), (0, PAD_OUT - N_ACTIONS))).astype(jnp.bfloat16)
    b2p = jnp.pad(b2, ((0, 0), (0, PAD_OUT - N_ACTIONS))).astype(jnp.float32)
    return w1p, b1p, w2p, b2p


@jax.jit
def net_forward(x, w1p, b1p, w2p, b2p):
    """Pallas forward pass of the DQN Net.

    x   : (B, N_STATES) float32 (unpadded)
    w1p : (N_STATES, 256) bfloat16,  b1p: (1, 256) float32
    w2p : (256, PAD_OUT) bfloat16,   b2p: (1, PAD_OUT) float32
    returns (B, N_ACTIONS) float32
    """
    B, K = x.shape

    if B <= SMALL_BATCH_MAX:
        # Single invocation, everything resident in VMEM, no grid machinery.
        out = pl.pallas_call(
            _mlp_kernel,
            out_shape=jax.ShapeDtypeStruct((B, PAD_OUT), jnp.float32),
            in_specs=[pl.BlockSpec(memory_space=pltpu.MemorySpace.VMEM)] * 5,
            out_specs=pl.BlockSpec(memory_space=pltpu.MemorySpace.VMEM),
            cost_estimate=_cost_estimate(B),
        )(x, w1p, b1p, w2p, b2p)
        return out[:, :N_ACTIONS]

    # Large-batch path: tile the batch axis, keep weights/biases VMEM-resident.
    # Tile chosen so there are always >= 2 grid steps (v7x has 2 TensorCores)
    # while staying as large as possible (per-grid-step overhead ~0.35 us).
    tb = min(MAX_TB, _round_up(pl.cdiv(B, 2), 256))
    n_tiles = pl.cdiv(B, tb)
    # No batch padding: Pallas masks the partial last block. Safe because the
    # computation is row-independent and OOB output rows are discarded.
    out = pl.pallas_call(
        _mlp_kernel,
        out_shape=jax.ShapeDtypeStruct((B, PAD_OUT), jnp.float32),
        grid=(n_tiles,),
        in_specs=[
            pl.BlockSpec((tb, K), lambda i: (i, 0)),          # x (full-extent K)
            pl.BlockSpec((K, HIDDEN), lambda i: (0, 0)),      # w1, VMEM-resident
            pl.BlockSpec((1, HIDDEN), lambda i: (0, 0)),      # b1
            pl.BlockSpec((HIDDEN, PAD_OUT), lambda i: (0, 0)),  # w2
            pl.BlockSpec((1, PAD_OUT), lambda i: (0, 0)),     # b2
        ],
        out_specs=pl.BlockSpec((tb, PAD_OUT), lambda i: (i, 0)),
        compiler_params=pltpu.CompilerParams(
            dimension_semantics=("parallel",),
            vmem_limit_bytes=64 << 20,   # headroom on v5e's 16 MiB default
        ),
        cost_estimate=_cost_estimate(B),
    )(x, w1p, b1p, w2p, b2p)
    return out[:, :N_ACTIONS]


def init_params(key):
    """Deterministic parameter init matching the PyTorch module's shapes.

    PyTorch: weight ~ Normal(0, 0.1) (explicit in __init__);
             bias   ~ Uniform(-1/sqrt(fan_in), 1/sqrt(fan_in)) (nn.Linear default).
    Weights stored as [in_features, out_features] (transposed vs. PyTorch).
    """
    k1, k2, k3, k4 = jax.random.split(key, 4)
    w1 = 0.1 * jax.random.normal(k1, (N_STATES, HIDDEN), dtype=jnp.float32)
    bound1 = 1.0 / jnp.sqrt(jnp.float32(N_STATES))
    b1 = jax.random.uniform(
        k2, (1, HIDDEN), minval=-bound1, maxval=bound1, dtype=jnp.float32
    )
    w2 = 0.1 * jax.random.normal(k3, (HIDDEN, N_ACTIONS), dtype=jnp.float32)
    bound2 = 1.0 / jnp.sqrt(jnp.float32(HIDDEN))
    b2 = jax.random.uniform(
        k4, (1, N_ACTIONS), minval=-bound2, maxval=bound2, dtype=jnp.float32
    )
    return w1, b1, w2, b2


def reference_forward(x, w1, b1, w2, b2):
    h = jnp.maximum(x @ w1 + b1, 0.0)
    return h @ w2 + b2


if __name__ == "__main__":
    key = jax.random.PRNGKey(0)
    kx, kp, kx2 = jax.random.split(key, 3)
    w1, b1, w2, b2 = init_params(kp)
    # One-time param prep (pads + bf16 cast hoisted out of the forward).
    w1p, b1p, w2p, b2p = prepare_params(w1, b1, w2, b2)

    # bf16 matmul operands (f32 accumulation) -> relaxed tolerances vs. f32 ref.
    ATOL = 5e-2
    RTOL = 5e-2

    # Small-batch path (single VMEM block, no grid).
    batch = 8
    x = jax.random.normal(kx, (batch, N_STATES), dtype=jnp.float32)
    out = jax.block_until_ready(net_forward(x, w1p, b1p, w2p, b2p))
    ref = reference_forward(x, w1, b1, w2, b2)
    assert out.shape == (batch, N_ACTIONS)
    assert jnp.allclose(out, ref, atol=ATOL, rtol=RTOL)

    # Large-batch path (batch-tiled grid, >=2 parallel steps, partial last block).
    big_batch = 1500
    xb = jax.random.normal(kx2, (big_batch, N_STATES), dtype=jnp.float32)
    out_b = jax.block_until_ready(net_forward(xb, w1p, b1p, w2p, b2p))
    ref_b = reference_forward(xb, w1, b1, w2, b2)
    assert out_b.shape == (big_batch, N_ACTIONS)
    assert jnp.allclose(out_b, ref_b, atol=ATOL, rtol=RTOL)

    print("KERNEL_OK")
</pallas_src>

<mosaic_0001>
module attributes {stable_mosaic.version = 11 : i64} {
  func.func @_mlp_kernel(%arg0: memref<8x49xf32, #tpu.memory_space<vmem>>, %arg1: memref<49x256xbf16, #tpu.memory_space<vmem>>, %arg2: memref<1x256xf32, #tpu.memory_space<vmem>>, %arg3: memref<256x128xbf16, #tpu.memory_space<vmem>>, %arg4: memref<1x128xf32, #tpu.memory_space<vmem>>, %arg5: memref<8x128xf32, #tpu.memory_space<vmem>>) attributes {dimension_semantics = [], scalar_prefetch = 0 : i64, scratch_operands = 0 : i64, tpu.core_type = #tpu.core_type<tc>} {
    %c0 = arith.constant 0 : index
    %c0_0 = arith.constant 0 : index
    %0 = vector.load %arg0[%c0, %c0_0] : memref<8x49xf32, #tpu.memory_space<vmem>>, vector<8x49xf32>
    %1 = arith.truncf %0 : vector<8x49xf32> to vector<8x49xbf16>
    %c0_1 = arith.constant 0 : index
    %c0_2 = arith.constant 0 : index
    %2 = vector.load %arg1[%c0_1, %c0_2] : memref<49x256xbf16, #tpu.memory_space<vmem>>, vector<49x256xbf16>
    %cst = arith.constant dense<0.000000e+00> : vector<8x256xf32>
    %3 = tpu.matmul %1, %2, %cst {dimension_numbers = #tpu.dot_dimension_numbers<[1], [0], [0], [1], [0, 0, 1, 1], [], []>} : vector<8x49xbf16>, vector<49x256xbf16>, vector<8x256xf32> -> vector<8x256xf32>
    %c0_3 = arith.constant 0 : index
    %c0_4 = arith.constant 0 : index
    %4 = vector.load %arg2[%c0_3, %c0_4] : memref<1x256xf32, #tpu.memory_space<vmem>>, vector<1x256xf32>
    %5 = vector.broadcast %4 : vector<1x256xf32> to vector<8x256xf32>
    %6 = arith.addf %3, %5 : vector<8x256xf32>
    %cst_5 = arith.constant 0.000000e+00 : f32
    %7 = vector.broadcast %cst_5 : f32 to vector<8x256xf32>
    %8 = arith.maximumf %6, %7 : vector<8x256xf32>
    %9 = arith.truncf %8 : vector<8x256xf32> to vector<8x256xbf16>
    %c0_6 = arith.constant 0 : index
    %c0_7 = arith.constant 0 : index
    %10 = vector.load %arg3[%c0_6, %c0_7] : memref<256x128xbf16, #tpu.memory_space<vmem>>, vector<256x128xbf16>
    %cst_8 = arith.constant dense<0.000000e+00> : vector<8x128xf32>
    %11 = tpu.matmul %9, %10, %cst_8 {dimension_numbers = #tpu.dot_dimension_numbers<[1], [0], [0], [1], [0, 0, 1, 1], [], []>} : vector<8x256xbf16>, vector<256x128xbf16>, vector<8x128xf32> -> vector<8x128xf32>
    %c0_9 = arith.constant 0 : index
    %c0_10 = arith.constant 0 : index
    %12 = vector.load %arg4[%c0_9, %c0_10] : memref<1x128xf32, #tpu.memory_space<vmem>>, vector<1x128xf32>
    %13 = vector.broadcast %12 : vector<1x128xf32> to vector<8x128xf32>
    %14 = arith.addf %11, %13 : vector<8x128xf32>
    %c0_11 = arith.constant 0 : index
    %c0_12 = arith.constant 0 : index
    %15 = vector.load %arg5[%c0_11, %c0_12] : memref<8x128xf32, #tpu.memory_space<vmem>>, vector<8x128xf32>
    tpu.vector_store %arg5[%c0_11, %c0_12], %14 {strides = array<i32>} : memref<8x128xf32, #tpu.memory_space<vmem>>, vector<8x128xf32>,
    return
  }
}

</mosaic_0001>

<llo_original>
// kernel: net_forward.1
$region0: #{net_forward.1}
  #allocation0 [shape = 'u32[]', space=smem, size = 0x4, offset = 0x4, fixed_abs, tag = 'smem constant byte address 0x4 - core index']
  #allocation1 [shape = 'u32[144,128]{1,0:T(1,128)}', space=vmem, size = 0x12000, scoped, tag = 'internal scratch']
  %s0 = inlined_call_operand.hbm [shape: f32[8,49], index: 0, kind: input, shape index: {}]
  %s1 = inlined_call_operand.hbm [shape: bf16[49,256], index: 1, kind: input, shape index: {}]
  %s2 = inlined_call_operand.vmem [shape: f32[1,256], index: 2, kind: input, shape index: {}]
  %s3 = inlined_call_operand.hbm [shape: bf16[256,128], index: 3, kind: input, shape index: {}]
  %s4 = inlined_call_operand.vmem [shape: f32[1,128], index: 4, kind: input, shape index: {}]
  %s5 = inlined_call_operand.hbm [shape: f32[8,128], index: 5, kind: output, shape index: {}]
  %s6 = sld [smem:[#allocation0]]
  $region42: #{net_forward.1} parent=0
    _
  %s8 = ssub.s32 1, %s6
  %s9 = scalar_select 0, %s8, %s6
  $region1: #{net_forward.1} parent=0
    #allocation2 [shape = 'u8[4096]{0}', space=vmem, size = 0x1000, scoped, tag = 'input window, operand 0, single buffered']
    #allocation3 [shape = 's32[1]{0}', space=sflag, size = 0x4, scoped, tag = 'scoped memory for net_forward.1']
    #allocation4 [shape = 's32[1]{0}', space=sflag, size = 0x4, scoped, tag = 'scoped memory for net_forward.1']
    #allocation5 [shape = 'u8[28672]{0}', space=vmem, size = 0x7000, scoped, tag = 'input window, operand 1, single buffered']
    #allocation6 [shape = 's32[1]{0}', space=sflag, size = 0x4, scoped, tag = 'scoped memory for net_forward.1']
    #allocation7 [shape = 'u8[65536]{0}', space=vmem, size = 0x10000, scoped, tag = 'input window, operand 3, single buffered']
    #allocation8 [shape = 'u8[4096]{0}', space=vmem, size = 0x1000, scoped, tag = 'output window, operand 0, single buffered']
    %10 = vsyncpa [#allocation3], 0
    %11 = vsyncpa [#allocation6], 0
    %12 = vsyncpa [#allocation4], 0
    // Predicated region
    $region2: #{net_forward.1} parent=1 // pred_check
      _
    $region3: #{net_forward.1} parent=1 // pred_check_branch
      %14 = sbr.rel (0) target = $region5
    $region4: #{net_forward.1} parent=1 // pred_region
      %s16 = ssub.s32 128, 128
      %17 = vsyncadd [#allocation3], %s16
      %s19 = sshll.u32 [#allocation2], 4
      %s20 = int_to_ptr.vmem [resolvable:$true] %s19
      %22 = dma.hbm_to_vmem [thread:$0]  %s0, 128, %s20, [#allocation3]
    $region5: #{net_forward.1} parent=1 // pred_fallthru
      _
    // Predicated region
    $region6: #{net_forward.1} parent=1 // pred_check
      _
    $region7: #{net_forward.1} parent=1 // pred_check_branch
      %24 = sbr.rel (0) target = $region9
    $region8: #{net_forward.1} parent=1 // pred_region
      %s26 = ssub.s32 896, 896
      %27 = vsyncadd [#allocation6], %s26
      %s28 = sshll.u32 [#allocation5], 4
      %s29 = int_to_ptr.vmem [resolvable:$true] %s28
      %34 = dma.hbm_to_vmem [thread:$0]  %s1, 896, %s29, [#allocation6], 128, 128, 8
    $region9: #{net_forward.1} parent=1 // pred_fallthru
      _
    // Predicated region
    $region10: #{net_forward.1} parent=1 // pred_check
      _
    $region11: #{net_forward.1} parent=1 // pred_check_branch
      %36 = sbr.rel (0) target = $region13
    $region12: #{net_forward.1} parent=1 // pred_region
      _
    $region13: #{net_forward.1} parent=1 // pred_fallthru
      _
    // Predicated region
    $region14: #{net_forward.1} parent=1 // pred_check
      _
    $region15: #{net_forward.1} parent=1 // pred_check_branch
      %38 = sbr.rel (0) target = $region17
    $region16: #{net_forward.1} parent=1 // pred_region
      %s40 = ssub.s32 2048, 2048
      %41 = vsyncadd [#allocation6], %s40
      %s42 = sshll.u32 [#allocation7], 4
      %s43 = int_to_ptr.vmem [resolvable:$true] %s42
      %48 = dma.hbm_to_vmem [thread:$0]  %s3, 2048, %s43, [#allocation6], 64, 64, 4
    $region17: #{net_forward.1} parent=1 // pred_fallthru
      _
    // Predicated region
    $region18: #{net_forward.1} parent=1 // pred_check
      _
    $region19: #{net_forward.1} parent=1 // pred_check_branch
      %50 = sbr.rel (0) target = $region21
    $region20: #{net_forward.1} parent=1 // pred_region
      _
    $region21: #{net_forward.1} parent=1 // pred_fallthru
      _
    // Predicated region
    $region22: #{net_forward.1} parent=1 // pred_check
      _
    $region23: #{net_forward.1} parent=1 // pred_check_branch
      %52 = sbr.rel (0) target = $region25
    $region24: #{net_forward.1} parent=1 // pred_region
      %53 = dma.done [#allocation3], 128
    $region25: #{net_forward.1} parent=1 // pred_fallthru
      _
    // Predicated region
    $region26: #{net_forward.1} parent=1 // pred_check
      _
    $region27: #{net_forward.1} parent=1 // pred_check_branch
      %55 = sbr.rel (0) target = $region29
    $region28: #{net_forward.1} parent=1 // pred_region
      %56 = dma.done [#allocation6], 896
    $region29: #{net_forward.1} parent=1 // pred_fallthru
      _
    // Predicated region
    $region30: #{net_forward.1} parent=1 // pred_check
      _
    $region31: #{net_forward.1} parent=1 // pred_check_branch
      %58 = sbr.rel (0) target = $region33
    $region32: #{net_forward.1} parent=1 // pred_region
      %59 = dma.done [#allocation6], 2048
    $region33: #{net_forward.1} parent=1 // pred_fallthru
      _
    %v61 = vld [vmem:[#allocation2] sm:$0xff]
    %v62 = vpack.c.bf16 %v61, %v61
    %v63 = vld [vmem:[#allocation5] sm:$0xff]
    %v64 = vld [vmem:[#allocation5 + $0x8] sm:$0xff]
    %v65 = vld [vmem:[#allocation5 + $0x10] sm:$0xff]
    %v66 = vld [vmem:[#allocation5 + $0x18] sm:$0xff]
    %v67 = vld [vmem:[#allocation5 + $0x20] sm:$0xff]
    %v68 = vld [vmem:[#allocation5 + $0x28] sm:$0xff]
    %v69 = vld [vmem:[#allocation5 + $0x30] sm:$0x11]
    %v70 = vld [vmem:[%s2] sm:$0x3]
    %v72 = vlaneseq
    %v73 = vshrl.u32 %v72, 7
    %v74 = vsub.s32 0, %v73
    %v75 = vrot.slane %v70, %v74
    %v76 = vlaneseq
    %v77 = vshrl.u32 %v76, 7
    %v78 = vsub.s32 1, %v77
    %v79 = vrot.slane %v70, %v78
    %v89 = vunpack.c.l.b16 %v63
    %v90 = vunpack.c.h.b16 %v63
    %v91 = vunpack.c.l.b16 %v64
    %v92 = vunpack.c.h.b16 %v64
    %v93 = vunpack.c.l.b16 %v65
    %v94 = vunpack.c.h.b16 %v65
    %v95 = vunpack.c.l.b16 %v66
    %v96 = vunpack.c.h.b16 %v66
    %v97 = vunpack.c.l.b16 %v67
    %v98 = vunpack.c.h.b16 %v67
    %v99 = vunpack.c.l.b16 %v68
    %v100 = vunpack.c.h.b16 %v68
    %v101 = vunpack.c.l.b16 %v69
    %v102 = vunpack.c.h.b16 %v69
    %v103 = vpack.c.b16 %v91, %v89
    %v104 = vpack.c.b16 %v92, %v90
    %v105 = vpack.c.b16 %v95, %v93
    %v106 = vpack.c.b16 %v96, %v94
    %v107 = vpack.c.b16 %v99, %v97
    %v108 = vpack.c.b16 %v100, %v98
    %v109 = vpack.c.b16 %v101, %v101
    %v110 = vpack.c.b16 %v102, %v102
    %vm117 = vcmask 400384
    %v119 = vsel %vm117, %v62, 0
    %vm121 = vcmask 1040384
    %v122 = vsel 0, 4294967295, 65535
    %v123 = vsel %vm121, %v122, 0
    %v125 = vand.u32 %v109, %v123
    %v128 = vand.u32 %v110, %v123
    %130 = vmatprep.subr.bf16.mxu0 0
    %131 = vmatpush1.bf16.msra.mxu0 0
    %132 = vmatprep.subr.bf16.mxu0 0
    %133 = vmatpush1.bf16.msra.mxu0 0
    %134 = vmatprep.subr.bf16.mxu0 0
    %135 = vmatpush1.bf16.msra.mxu0 0
    %136 = vmatprep.subr.bf16.mxu0 0
    %137 = vmatpush1.bf16.msra.mxu0 0
    %138 = vmatprep.subr.bf16.mxu0 %v128
    %139 = vmatpush1.bf16.msra.mxu0 %v125
    %140 = vmatprep.subr.bf16.mxu0 %v108
    %141 = vmatpush1.bf16.msra.mxu0 %v107
    %142 = vmatprep.subr.bf16.mxu0 %v106
    %143 = vmatpush1.bf16.msra.mxu0 %v105
    %144 = vmatprep.subr.bf16.mxu0 %v104
    %145 = vmatpush1.bf16.msra.mxu0 %v103
    %146 = vmatprep.subr.bf16.mxu0 0
    %147 = vmatpush2.bf16.msra.mxu0 0
    %148 = vmatprep.subr.bf16.mxu0 0
    %149 = vmatpush2.bf16.msra.mxu0 0
    %150 = vmatprep.subr.bf16.mxu0 0
    %151 = vmatpush2.bf16.msra.mxu0 0
    %152 = vmatprep.subr.bf16.mxu0 0
    %153 = vmatpush2.bf16.msra.mxu0 0
    %154 = vmatprep.subr.bf16.mxu0 0
    %155 = vmatpush2.bf16.msra.mxu0 0
    %156 = vmatprep.subr.bf16.mxu0 0
    %157 = vmatpush2.bf16.msra.mxu0 0
    %158 = vmatprep.subr.bf16.mxu0 0
    %159 = vmatpush2.bf16.msra.mxu0 0
    %160 = vmatprep.subr.bf16.mxu0 0
    %161 = vmatpush2.bf16.msra.mxu0 0
    %162 = vmatprep.mubr.bf16.mxu0 0
    %163 = vmatmul.mubr.bf16.gmra.mxu0 %v119
    %v164 = vpop.f32.mrf.mxu0
    %v165 = vadd.f32 %v75, %v164
    %v166 = vpop.f32.mrf.mxu0
    %v167 = vadd.f32 %v79, %v166
    %v168 = vpop.f32.mrf.mxu0
    %v169 = vpop.f32.mrf.mxu0
    %170 = vdwg.mxu0
    %v171 = vmax.f32 %v165, 0.0
    %v172 = vmax.f32 %v167, 0.0
    %v173 = vpack.c.bf16 %v171, %v171
    %v174 = vpack.c.bf16 %v172, %v172
    %v175 = vld [vmem:[#allocation7] sm:$0xf]
    %v176 = vld [vmem:[#allocation7 + $0x4] sm:$0xf]
    %v177 = vld [vmem:[#allocation7 + $0x8] sm:$0xf]
    %v178 = vld [vmem:[#allocation7 + $0xc] sm:$0xf]
    %v179 = vld [vmem:[#allocation7 + $0x10] sm:$0xf]
    %v180 = vld [vmem:[#allocation7 + $0x14] sm:$0xf]
    %v181 = vld [vmem:[#allocation7 + $0x18] sm:$0xf]
    %v182 = vld [vmem:[#allocation7 + $0x1c] sm:$0xf]
    %v183 = vld [vmem:[#allocation7 + $0x20] sm:$0xf]
    %v184 = vld [vmem:[#allocation7 + $0x24] sm:$0xf]
    %v185 = vld [vmem:[#allocation7 + $0x28] sm:$0xf]
    %v186 = vld [vmem:[#allocation7 + $0x2c] sm:$0xf]
    %v187 = vld [vmem:[#allocation7 + $0x30] sm:$0xf]
    %v188 = vld [vmem:[#allocation7 + $0x34] sm:$0xf]
    %v189 = vld [vmem:[#allocation7 + $0x38] sm:$0xf]
    %v190 = vld [vmem:[#allocation7 + $0x3c] sm:$0xf]
    %v191 = vld [vmem:[#allocation7 + $0x40] sm:$0xf]
    %v192 = vld [vmem:[#allocation7 + $0x44] sm:$0xf]
    %v193 = vld [vmem:[#allocation7 + $0x48] sm:$0xf]
    %v194 = vld [vmem:[#allocation7 + $0x4c] sm:$0xf]
    %v195 = vld [vmem:[#allocation7 + $0x50] sm:$0xf]
    %v196 = vld [vmem:[#allocation7 + $0x54] sm:$0xf]
    %v197 = vld [vmem:[#allocation7 + $0x58] sm:$0xf]
    %v198 = vld [vmem:[#allocation7 + $0x5c] sm:$0xf]
    %v199 = vld [vmem:[#allocation7 + $0x60] sm:$0xf]
    %v200 = vld [vmem:[#allocation7 + $0x64] sm:$0xf]
    %v201 = vld [vmem:[#allocation7 + $0x68] sm:$0xf]
    %v202 = vld [vmem:[#allocation7 + $0x6c] sm:$0xf]
    %v203 = vld [vmem:[#allocation7 + $0x70] sm:$0xf]
    %v204 = vld [vmem:[#allocation7 + $0x74] sm:$0xf]
    %v205 = vld [vmem:[#allocation7 + $0x78] sm:$0xf]
    %v206 = vld [vmem:[#allocation7 + $0x7c] sm:$0xf]
    %v207 = vld [vmem:[%s4] sm:$0x1]
    %v209 = vlaneseq
    %v210 = vshrl.u32 %v209, 7
    %v211 = vsub.s32 0, %v210
    %v212 = vrot.slane %v207, %v211
    %v246 = vunpack.c.l.b16 %v175
    %v247 = vunpack.c.l.b16 %v176
    %v248 = vunpack.c.l.b16 %v177
    %v249 = vunpack.c.l.b16 %v178
    %v250 = vunpack.c.l.b16 %v179
    %v251 = vunpack.c.l.b16 %v180
    %v252 = vunpack.c.l.b16 %v181
    %v253 = vunpack.c.l.b16 %v182
    %v254 = vunpack.c.l.b16 %v183
    %v255 = vunpack.c.l.b16 %v184
    %v256 = vunpack.c.l.b16 %v185
    %v257 = vunpack.c.l.b16 %v186
    %v258 = vunpack.c.l.b16 %v187
    %v259 = vunpack.c.l.b16 %v188
    %v260 = vunpack.c.l.b16 %v189
    %v261 = vunpack.c.l.b16 %v190
    %v262 = vunpack.c.l.b16 %v191
    %v263 = vunpack.c.l.b16 %v192
    %v264 = vunpack.c.l.b16 %v193
    %v265 = vunpack.c.l.b16 %v194
    %v266 = vunpack.c.l.b16 %v195
    %v267 = vunpack.c.l.b16 %v196
    %v268 = vunpack.c.l.b16 %v197
    %v269 = vunpack.c.l.b16 %v198
    %v270 = vunpack.c.l.b16 %v199
    %v271 = vunpack.c.l.b16 %v200
    %v272 = vunpack.c.l.b16 %v201
    %v273 = vunpack.c.l.b16 %v202
    %v274 = vunpack.c.l.b16 %v203
    %v275 = vunpack.c.l.b16 %v204
    %v276 = vunpack.c.l.b16 %v205
    %v277 = vunpack.c.l.b16 %v206
    %v278 = vpack.c.b16 %v247, %v246
    %v279 = vpack.c.b16 %v249, %v248
    %v280 = vpack.c.b16 %v251, %v250
    %v281 = vpack.c.b16 %v253, %v252
    %v282 = vpack.c.b16 %v255, %v254
    %v283 = vpack.c.b16 %v257, %v256
    %v284 = vpack.c.b16 %v259, %v258
    %v285 = vpack.c.b16 %v261, %v260
    %v286 = vpack.c.b16 %v263, %v262
    %v287 = vpack.c.b16 %v265, %v264
    %v288 = vpack.c.b16 %v267, %v266
    %v289 = vpack.c.b16 %v269, %v268
    %v290 = vpack.c.b16 %v271, %v270
    %v291 = vpack.c.b16 %v273, %v272
    %v292 = vpack.c.b16 %v275, %v274
    %v293 = vpack.c.b16 %v277, %v276
    %310 = vmatprep.subr.bf16.mxu0 0
    %311 = vmatpush1.bf16.msra.mxu0 %v285
    %312 = vmatprep.subr.bf16.mxu0 0
    %313 = vmatpush1.bf16.msra.mxu0 %v284
    %314 = vmatprep.subr.bf16.mxu0 0
    %315 = vmatpush1.bf16.msra.mxu0 %v283
    %316 = vmatprep.subr.bf16.mxu0 0
    %317 = vmatpush1.bf16.msra.mxu0 %v282
    %318 = vmatprep.subr.bf16.mxu0 0
    %319 = vmatpush1.bf16.msra.mxu0 %v281
    %320 = vmatprep.subr.bf16.mxu0 0
    %321 = vmatpush1.bf16.msra.mxu0 %v280
    %322 = vmatprep.subr.bf16.mxu0 0
    %323 = vmatpush1.bf16.msra.mxu0 %v279
    %324 = vmatprep.subr.bf16.mxu0 0
    %325 = vmatpush1.bf16.msra.mxu0 %v278
    %326 = vmatprep.subr.bf16.mxu0 0
    %327 = vmatpush2.bf16.msra.mxu0 %v293
    %328 = vmatprep.subr.bf16.mxu0 0
    %329 = vmatpush2.bf16.msra.mxu0 %v292
    %330 = vmatprep.subr.bf16.mxu0 0
    %331 = vmatpush2.bf16.msra.mxu0 %v291
    %332 = vmatprep.subr.bf16.mxu0 0
    %333 = vmatpush2.bf16.msra.mxu0 %v290
    %334 = vmatprep.subr.bf16.mxu0 0
    %335 = vmatpush2.bf16.msra.mxu0 %v289
    %336 = vmatprep.subr.bf16.mxu0 0
    %337 = vmatpush2.bf16.msra.mxu0 %v288
    %338 = vmatprep.subr.bf16.mxu0 0
    %339 = vmatpush2.bf16.msra.mxu0 %v287
    %340 = vmatprep.subr.bf16.mxu0 0
    %341 = vmatpush2.bf16.msra.mxu0 %v286
    %342 = vmatprep.mubr.bf16.mxu0 %v174
    %343 = vmatmul.mubr.bf16.gmra.mxu0 %v173
    %v344 = vpop.f32.mrf.mxu0
    %v345 = vadd.f32 %v212, %v344
    %v346 = vpop.f32.mrf.mxu0
    %v347 = vpop.f32.mrf.mxu0
    %v348 = vpop.f32.mrf.mxu0
    %349 = vdwg.mxu0
    %350 = vst [vmem:[#allocation8] sm:$0xff] %v345
    // Predicated region
    $region34: #{net_forward.1} parent=1 // pred_check
      _
    $region35: #{net_forward.1} parent=1 // pred_check_branch
      %352 = sbr.rel (0) target = $region37
    $region36: #{net_forward.1} parent=1 // pred_region
      %s354 = ssub.s32 128, 128
      %355 = vsyncadd [#allocation4], %s354
      %s357 = sshll.u32 [#allocation8], 4
      %s358 = int_to_ptr.vmem [resolvable:$true] %s357
      %360 = dma.vmem_to_hbm [thread:$0]  %s358, 128, %s5, [#allocation4]
    $region37: #{net_forward.1} parent=1 // pred_fallthru
      _
    // Predicated region
    $region38: #{net_forward.1} parent=1 // pred_check
      _
    $region39: #{net_forward.1} parent=1 // pred_check_branch
      %362 = sbr.rel (0) target = $region41
    $region40: #{net_forward.1} parent=1 // pred_region
      %363 = dma.done [#allocation4], 128
    $region41: #{net_forward.1} parent=1 // pred_fallthru
      _
    %364 = vsyncpa [#allocation3], 1
    %365 = vsyncpa [#allocation6], 1
    %366 = vsyncpa [#allocation4], 1

</llo_original>
